<compile_context>
chip_gen: v5e
topology: v5e:2x2
jax: 0.10.0
libtpu: 0.0.40
codegen_flags: <defaults>
</compile_context>

<pallas_src>
import functools
import math

import jax
import jax.numpy as jnp
from jax import lax
from jax.experimental import pallas as pl
from jax.experimental.pallas import tpu as pltpu


def egc_kernel(adj_ref, x_ref, wt_ref, b_ref, o_ref, m_ref, *, coeff):
    """Whole EGC forward: fold norm once, project first, bf16 propagation."""
    adj = adj_ref[...]                                            # (N, N) f32
    # in-degree of node i = sum_j adj[i, j]; clamp(min=1) as in DGL code paths
    deg = jnp.maximum(jnp.sum(adj, axis=1, keepdims=True), 1.0)   # (N, 1)
    inv_deg = 1.0 / deg
    norm = lax.rsqrt(deg)                                         # D^{-1/2}
    sqrt_deg = deg * norm                                         # D^{+1/2}

    # Fold the normalization once:  M = D^{-1} A  (row scaling only), kept in bf16
    # VMEM scratch so the K-step loop is pure MXU work.
    m_ref[...] = (inv_deg * adj).astype(jnp.bfloat16)             # (N, N) bf16
    m = m_ref[...]

    # Linear readout first (exact by linearity):  y = X @ W^T  (O padded to 128 lanes)
    y = jnp.dot(x_ref[...], wt_ref[...], preferred_element_type=jnp.float32)

    # Propagate in the D^{-1/2}-scaled domain:  Ahat^k y = D^{1/2} M^k (D^{-1/2} y)
    xk = norm * y                                                 # (N, O_pad) f32
    h = coeff[0] * xk
    # K_eff is small and static -> unrolled; each step is one bf16 MXU matmul.
    for k in range(1, len(coeff)):
        xk = jnp.dot(m, xk.astype(jnp.bfloat16),
                     preferred_element_type=jnp.float32)
        h = h + coeff[k] * xk

    # Undo the D^{1/2} scaling and add bias; O_pad is a multiple of 128 -> dense stores.
    o_ref[...] = sqrt_deg * h + b_ref[...]


def egc_forward(x, adj, weight, bias, *, K=20, t=1.0):
    """x: (N, F) f32, adj: (N, N) f32, weight: (O, F), bias: (O,) -> (N, O)."""
    N, F = x.shape
    O = weight.shape[0]
    O_pad = max(128, ((O + 127) // 128) * 128)   # lane-dense output / weight width

    # Heat-kernel coefficients, truncated where they stop mattering at f32.
    coeff_full = [float(math.exp(-t) * t**k / math.factorial(k)) for k in range(K + 1)]
    cmax = max(coeff_full)
    k_eff = K
    while k_eff > 0 and coeff_full[k_eff] < 1e-7 * cmax:
        k_eff -= 1
    coeff = tuple(coeff_full[: k_eff + 1])

    # Zero-pad W^T and bias along the output (lane) axis.
    wt = jnp.zeros((F, O_pad), jnp.float32).at[:, :O].set(
        weight.T.astype(jnp.float32))
    b = jnp.zeros((1, O_pad), jnp.float32).at[:, :O].set(
        bias.astype(jnp.float32))

    # Explicit VMEM budget (double-buffered input/output blocks + bf16 scratch + slack),
    # capped well under v7x's 64 MiB physical VMEM.
    vmem_bytes = int(2 * 4 * (N * N + N * F + F * O_pad + O_pad + N * O_pad)
                     + 2 * N * N) + (8 << 20)
    vmem_bytes = min(max(vmem_bytes, 16 << 20), 48 << 20)

    kernel = functools.partial(egc_kernel, coeff=coeff)
    out = pl.pallas_call(
        kernel,
        out_shape=jax.ShapeDtypeStruct((N, O_pad), jnp.float32),
        grid=(1,),
        in_specs=[
            pl.BlockSpec((N, N), lambda i: (0, 0)),       # adj
            pl.BlockSpec((N, F), lambda i: (0, 0)),       # x
            pl.BlockSpec((F, O_pad), lambda i: (0, 0)),   # W^T (padded)
            pl.BlockSpec((1, O_pad), lambda i: (0, 0)),   # bias (padded)
        ],
        out_specs=pl.BlockSpec((N, O_pad), lambda i: (0, 0)),
        scratch_shapes=[pltpu.VMEM((N, N), jnp.bfloat16)],   # M = D^{-1} A
        compiler_params=pltpu.CompilerParams(
            dimension_semantics=("arbitrary",),
            vmem_limit_bytes=vmem_bytes),
    )(adj.astype(jnp.float32), x.astype(jnp.float32), wt, b)
    return out[:, :O]


if __name__ == "__main__":
    key = jax.random.PRNGKey(0)
    N, in_features, out_features, K = 64, 32, 16, 20
    k1, k2, k3, k4 = jax.random.split(key, 4)

    # deterministic random undirected graph with self-loops (dense adjacency)
    a = (jax.random.uniform(k1, (N, N)) < 0.1).astype(jnp.float32)
    adj = jnp.maximum(a, a.T)
    adj = jnp.maximum(adj, jnp.eye(N, dtype=jnp.float32))

    x = jax.random.normal(k2, (N, in_features), dtype=jnp.float32)

    # nn.Linear(in_features, out_features): weight (O, F), bias (O,)
    bound = 1.0 / math.sqrt(in_features)
    weight = jax.random.uniform(
        k3, (out_features, in_features), minval=-bound, maxval=bound,
        dtype=jnp.float32)
    bias = jax.random.uniform(
        k4, (out_features,), minval=-bound, maxval=bound, dtype=jnp.float32)

    out = jax.block_until_ready(egc_forward(x, adj, weight, bias, K=K))

    # plain-JAX f32 reference (full K, no truncation, no bf16) for correctness
    deg = jnp.maximum(adj.sum(axis=1, keepdims=True), 1.0)
    nrm = 1.0 / jnp.sqrt(deg)
    coeff = [math.exp(-1.0) / math.factorial(k) for k in range(K + 1)]
    h = coeff[0] * x
    xk = x
    for k in range(1, K + 1):
        xk = nrm * (adj @ (nrm * xk))
        h = h + coeff[k] * xk
    ref = h @ weight.T + bias

    assert out.shape == (N, out_features)
    # bf16 propagation matmuls (f32 accumulation) + truncated tail terms -> loose tol.
    assert jnp.allclose(out, ref, atol=2e-2, rtol=2e-2), float(
        jnp.max(jnp.abs(out - ref)))
    print("KERNEL_OK")
</pallas_src>

<mosaic_0001>
module attributes {stable_mosaic.version = 11 : i64} {
  func.func @egc_kernel(%arg0: i32, %arg1: memref<64x64xf32, #tpu.memory_space<vmem>>, %arg2: memref<64x32xf32, #tpu.memory_space<vmem>>, %arg3: memref<32x128xf32, #tpu.memory_space<vmem>>, %arg4: memref<1x128xf32, #tpu.memory_space<vmem>>, %arg5: memref<64x128xf32, #tpu.memory_space<vmem>>, %arg6: memref<64x64xbf16, #tpu.memory_space<vmem>>) attributes {dimension_semantics = [#tpu.dimension_semantics<arbitrary>], iteration_bounds = array<i64: 1>, scalar_prefetch = 0 : i64, scratch_operands = 1 : i64, tpu.core_type = #tpu.core_type<tc>, window_params = [{pipeline_mode = #tpu.pipeline_mode<synchronous>, transform_indices = @transform_0, window_bounds = array<i64: 64, 64>}, {pipeline_mode = #tpu.pipeline_mode<synchronous>, transform_indices = @transform_1, window_bounds = array<i64: 64, 32>}, {pipeline_mode = #tpu.pipeline_mode<synchronous>, transform_indices = @transform_2, window_bounds = array<i64: 32, 128>}, {pipeline_mode = #tpu.pipeline_mode<synchronous>, transform_indices = @transform_3, window_bounds = array<i64: 1, 128>}, {pipeline_mode = #tpu.pipeline_mode<synchronous>, transform_indices = @transform_4, window_bounds = array<i64: 64, 128>}]} {
    %c0 = arith.constant 0 : index
    %c0_0 = arith.constant 0 : index
    %0 = vector.load %arg1[%c0, %c0_0] : memref<64x64xf32, #tpu.memory_space<vmem>>, vector<64x64xf32>
    %cst = arith.constant dense<0.000000e+00> : vector<64xf32>
    %1 = vector.multi_reduction <add>, %0, %cst [1] : vector<64x64xf32> to vector<64xf32>
    %2 = vector.shape_cast %1 : vector<64xf32> to vector<64x1xf32>
    %cst_1 = arith.constant 1.000000e+00 : f32
    %3 = vector.broadcast %cst_1 : f32 to vector<64x1xf32>
    %4 = arith.maximumf %2, %3 : vector<64x1xf32>
    %cst_2 = arith.constant 1.000000e+00 : f32
    %5 = vector.broadcast %cst_2 : f32 to vector<64x1xf32>
    %6 = arith.divf %5, %4 : vector<64x1xf32>
    %7 = math.rsqrt %4 : vector<64x1xf32>
    %8 = arith.mulf %4, %7 : vector<64x1xf32>
    %9 = vector.broadcast %6 : vector<64x1xf32> to vector<64x64xf32>
    %10 = arith.mulf %9, %0 : vector<64x64xf32>
    %11 = arith.truncf %10 : vector<64x64xf32> to vector<64x64xbf16>
    %c0_3 = arith.constant 0 : index
    %c0_4 = arith.constant 0 : index
    %12 = vector.load %arg6[%c0_3, %c0_4] : memref<64x64xbf16, #tpu.memory_space<vmem>>, vector<64x64xbf16>
    tpu.vector_store %arg6[%c0_3, %c0_4], %11 {strides = array<i32>} : memref<64x64xbf16, #tpu.memory_space<vmem>>, vector<64x64xbf16>,
    %c0_5 = arith.constant 0 : index
    %c0_6 = arith.constant 0 : index
    %13 = vector.load %arg6[%c0_5, %c0_6] : memref<64x64xbf16, #tpu.memory_space<vmem>>, vector<64x64xbf16>
    %c0_7 = arith.constant 0 : index
    %c0_8 = arith.constant 0 : index
    %14 = vector.load %arg2[%c0_7, %c0_8] : memref<64x32xf32, #tpu.memory_space<vmem>>, vector<64x32xf32>
    %c0_9 = arith.constant 0 : index
    %c0_10 = arith.constant 0 : index
    %15 = vector.load %arg3[%c0_9, %c0_10] : memref<32x128xf32, #tpu.memory_space<vmem>>, vector<32x128xf32>
    %cst_11 = arith.constant dense<0.000000e+00> : vector<64x128xf32>
    %16 = tpu.matmul %14, %15, %cst_11 {dimension_numbers = #tpu.dot_dimension_numbers<[1], [0], [0], [1], [0, 0, 1, 1], [], []>} : vector<64x32xf32>, vector<32x128xf32>, vector<64x128xf32> -> vector<64x128xf32>
    %17 = vector.broadcast %7 : vector<64x1xf32> to vector<64x128xf32>
    %18 = arith.mulf %17, %16 : vector<64x128xf32>
    %cst_12 = arith.constant 0.36787945 : f32
    %19 = vector.broadcast %cst_12 : f32 to vector<64x128xf32>
    %20 = arith.mulf %19, %18 : vector<64x128xf32>
    %21 = arith.truncf %18 : vector<64x128xf32> to vector<64x128xbf16>
    %cst_13 = arith.constant dense<0.000000e+00> : vector<64x128xf32>
    %22 = tpu.matmul %13, %21, %cst_13 {dimension_numbers = #tpu.dot_dimension_numbers<[1], [0], [0], [1], [0, 0, 1, 1], [], []>} : vector<64x64xbf16>, vector<64x128xbf16>, vector<64x128xf32> -> vector<64x128xf32>
    %cst_14 = arith.constant 0.36787945 : f32
    %23 = vector.broadcast %cst_14 : f32 to vector<64x128xf32>
    %24 = arith.mulf %23, %22 : vector<64x128xf32>
    %25 = arith.addf %20, %24 : vector<64x128xf32>
    %26 = arith.truncf %22 : vector<64x128xf32> to vector<64x128xbf16>
    %cst_15 = arith.constant dense<0.000000e+00> : vector<64x128xf32>
    %27 = tpu.matmul %13, %26, %cst_15 {dimension_numbers = #tpu.dot_dimension_numbers<[1], [0], [0], [1], [0, 0, 1, 1], [], []>} : vector<64x64xbf16>, vector<64x128xbf16>, vector<64x128xf32> -> vector<64x128xf32>
    %cst_16 = arith.constant 0.183939725 : f32
    %28 = vector.broadcast %cst_16 : f32 to vector<64x128xf32>
    %29 = arith.mulf %28, %27 : vector<64x128xf32>
    %30 = arith.addf %25, %29 : vector<64x128xf32>
    %31 = arith.truncf %27 : vector<64x128xf32> to vector<64x128xbf16>
    %cst_17 = arith.constant dense<0.000000e+00> : vector<64x128xf32>
    %32 = tpu.matmul %13, %31, %cst_17 {dimension_numbers = #tpu.dot_dimension_numbers<[1], [0], [0], [1], [0, 0, 1, 1], [], []>} : vector<64x64xbf16>, vector<64x128xbf16>, vector<64x128xf32> -> vector<64x128xf32>
    %cst_18 = arith.constant 0.0613132417 : f32
    %33 = vector.broadcast %cst_18 : f32 to vector<64x128xf32>
    %34 = arith.mulf %33, %32 : vector<64x128xf32>
    %35 = arith.addf %30, %34 : vector<64x128xf32>
    %36 = arith.truncf %32 : vector<64x128xf32> to vector<64x128xbf16>
    %cst_19 = arith.constant dense<0.000000e+00> : vector<64x128xf32>
    %37 = tpu.matmul %13, %36, %cst_19 {dimension_numbers = #tpu.dot_dimension_numbers<[1], [0], [0], [1], [0, 0, 1, 1], [], []>} : vector<64x64xbf16>, vector<64x128xbf16>, vector<64x128xf32> -> vector<64x128xf32>
    %cst_20 = arith.constant 0.0153283104 : f32
    %38 = vector.broadcast %cst_20 : f32 to vector<64x128xf32>
    %39 = arith.mulf %38, %37 : vector<64x128xf32>
    %40 = arith.addf %35, %39 : vector<64x128xf32>
    %41 = arith.truncf %37 : vector<64x128xf32> to vector<64x128xbf16>
    %cst_21 = arith.constant dense<0.000000e+00> : vector<64x128xf32>
    %42 = tpu.matmul %13, %41, %cst_21 {dimension_numbers = #tpu.dot_dimension_numbers<[1], [0], [0], [1], [0, 0, 1, 1], [], []>} : vector<64x64xbf16>, vector<64x128xbf16>, vector<64x128xf32> -> vector<64x128xf32>
    %cst_22 = arith.constant 0.00306566199 : f32
    %43 = vector.broadcast %cst_22 : f32 to vector<64x128xf32>
    %44 = arith.mulf %43, %42 : vector<64x128xf32>
    %45 = arith.addf %40, %44 : vector<64x128xf32>
    %46 = arith.truncf %42 : vector<64x128xf32> to vector<64x128xbf16>
    %cst_23 = arith.constant dense<0.000000e+00> : vector<64x128xf32>
    %47 = tpu.matmul %13, %46, %cst_23 {dimension_numbers = #tpu.dot_dimension_numbers<[1], [0], [0], [1], [0, 0, 1, 1], [], []>} : vector<64x64xbf16>, vector<64x128xbf16>, vector<64x128xf32> -> vector<64x128xf32>
    %cst_24 = arith.constant 5.10943646E-4 : f32
    %48 = vector.broadcast %cst_24 : f32 to vector<64x128xf32>
    %49 = arith.mulf %48, %47 : vector<64x128xf32>
    %50 = arith.addf %45, %49 : vector<64x128xf32>
    %51 = arith.truncf %47 : vector<64x128xf32> to vector<64x128xbf16>
    %cst_25 = arith.constant dense<0.000000e+00> : vector<64x128xf32>
    %52 = tpu.matmul %13, %51, %cst_25 {dimension_numbers = #tpu.dot_dimension_numbers<[1], [0], [0], [1], [0, 0, 1, 1], [], []>} : vector<64x64xbf16>, vector<64x128xbf16>, vector<64x128xf32> -> vector<64x128xf32>
    %cst_26 = arith.constant 7.29919557E-5 : f32
    %53 = vector.broadcast %cst_26 : f32 to vector<64x128xf32>
    %54 = arith.mulf %53, %52 : vector<64x128xf32>
    %55 = arith.addf %50, %54 : vector<64x128xf32>
    %56 = arith.truncf %52 : vector<64x128xf32> to vector<64x128xbf16>
    %cst_27 = arith.constant dense<0.000000e+00> : vector<64x128xf32>
    %57 = tpu.matmul %13, %56, %cst_27 {dimension_numbers = #tpu.dot_dimension_numbers<[1], [0], [0], [1], [0, 0, 1, 1], [], []>} : vector<64x64xbf16>, vector<64x128xbf16>, vector<64x128xf32> -> vector<64x128xf32>
    %cst_28 = arith.constant 9.12399446E-6 : f32
    %58 = vector.broadcast %cst_28 : f32 to vector<64x128xf32>
    %59 = arith.mulf %58, %57 : vector<64x128xf32>
    %60 = arith.addf %55, %59 : vector<64x128xf32>
    %61 = arith.truncf %57 : vector<64x128xf32> to vector<64x128xbf16>
    %cst_29 = arith.constant dense<0.000000e+00> : vector<64x128xf32>
    %62 = tpu.matmul %13, %61, %cst_29 {dimension_numbers = #tpu.dot_dimension_numbers<[1], [0], [0], [1], [0, 0, 1, 1], [], []>} : vector<64x64xbf16>, vector<64x128xbf16>, vector<64x128xf32> -> vector<64x128xf32>
    %cst_30 = arith.constant 1.01377714E-6 : f32
    %63 = vector.broadcast %cst_30 : f32 to vector<64x128xf32>
    %64 = arith.mulf %63, %62 : vector<64x128xf32>
    %65 = arith.addf %60, %64 : vector<64x128xf32>
    %66 = arith.truncf %62 : vector<64x128xf32> to vector<64x128xbf16>
    %cst_31 = arith.constant dense<0.000000e+00> : vector<64x128xf32>
    %67 = tpu.matmul %13, %66, %cst_31 {dimension_numbers = #tpu.dot_dimension_numbers<[1], [0], [0], [1], [0, 0, 1, 1], [], []>} : vector<64x64xbf16>, vector<64x128xbf16>, vector<64x128xf32> -> vector<64x128xf32>
    %cst_32 = arith.constant 1.01377715E-7 : f32
    %68 = vector.broadcast %cst_32 : f32 to vector<64x128xf32>
    %69 = arith.mulf %68, %67 : vector<64x128xf32>
    %70 = arith.addf %65, %69 : vector<64x128xf32>
    %71 = vector.broadcast %8 : vector<64x1xf32> to vector<64x128xf32>
    %72 = arith.mulf %71, %70 : vector<64x128xf32>
    %c0_33 = arith.constant 0 : index
    %c0_34 = arith.constant 0 : index
    %73 = vector.load %arg4[%c0_33, %c0_34] : memref<1x128xf32, #tpu.memory_space<vmem>>, vector<1x128xf32>
    %74 = vector.broadcast %73 : vector<1x128xf32> to vector<64x128xf32>
    %75 = arith.addf %72, %74 : vector<64x128xf32>
    %c0_35 = arith.constant 0 : index
    %c0_36 = arith.constant 0 : index
    %76 = vector.load %arg5[%c0_35, %c0_36] : memref<64x128xf32, #tpu.memory_space<vmem>>, vector<64x128xf32>
    tpu.vector_store %arg5[%c0_35, %c0_36], %75 {strides = array<i32>} : memref<64x128xf32, #tpu.memory_space<vmem>>, vector<64x128xf32>,
    return
  }
  func.func @transform_0(%arg0: i32) -> (i32, i32) {
    %c0_i32 = arith.constant 0 : i32
    %c0_i32_0 = arith.constant 0 : i32
    %c0_i32_1 = arith.constant 0 : i32
    return %c0_i32, %c0_i32_0 : i32, i32
  }
  func.func @transform_1(%arg0: i32) -> (i32, i32) {
    %c0_i32 = arith.constant 0 : i32
    %c0_i32_0 = arith.constant 0 : i32
    %c0_i32_1 = arith.constant 0 : i32
    return %c0_i32, %c0_i32_0 : i32, i32
  }
  func.func @transform_2(%arg0: i32) -> (i32, i32) {
    %c0_i32 = arith.constant 0 : i32
    %c0_i32_0 = arith.constant 0 : i32
    %c0_i32_1 = arith.constant 0 : i32
    return %c0_i32, %c0_i32_0 : i32, i32
  }
  func.func @transform_3(%arg0: i32) -> (i32, i32) {
    %c0_i32 = arith.constant 0 : i32
    %c0_i32_0 = arith.constant 0 : i32
    %c0_i32_1 = arith.constant 0 : i32
    return %c0_i32, %c0_i32_0 : i32, i32
  }
  func.func @transform_4(%arg0: i32) -> (i32, i32) {
    %c0_i32 = arith.constant 0 : i32
    %c0_i32_0 = arith.constant 0 : i32
    %c0_i32_1 = arith.constant 0 : i32
    return %c0_i32, %c0_i32_0 : i32, i32
  }
}

</mosaic_0001>

<llo_original>
// kernel: tpu_custom_call.1
$region0: #{tpu_custom_call.1}
  #allocation0 [shape = 'u32[]', space=smem, size = 0x4, offset = 0x4, fixed_abs, tag = 'smem constant byte address 0x4 - core index']
  #allocation1 [shape = 'u32[72,128]{1,0:T(1,128)}', space=vmem, size = 0x9000, scoped, tag = 'internal scratch']
  #allocation2 [shape = 'bf16[64,64]{1,0:T(8,128)(2,1)}', space=vmem, size = 0x4000, scoped, tag = 'scratch operand']
  %s0 = inlined_call_operand.vmem [shape: f32[64,64], index: 0, kind: input, shape index: {}]
  %s1 = inlined_call_operand.vmem [shape: f32[64,32], index: 1, kind: input, shape index: {}]
  %s2 = inlined_call_operand.vmem [shape: f32[32,128], index: 2, kind: input, shape index: {}]
  %s3 = inlined_call_operand.vmem [shape: f32[1,128], index: 3, kind: input, shape index: {}]
  %s4 = inlined_call_operand.hbm [shape: f32[64,128], index: 4, kind: output, shape index: {}]
  %s5 = sld [smem:[#allocation0]]
  $region26: #{tpu_custom_call.1} parent=0
    _
  %s7 = ssub.s32 1, %s5
  %s8 = scalar_select 0, %s7, %s5
  $region1: #{tpu_custom_call.1} parent=0
    #allocation3 [shape = 'u8[32768]{0}', space=vmem, size = 0x8000, scoped, tag = 'output window, operand 0, single buffered']
    #allocation4 [shape = 's32[1]{0}', space=sflag, size = 0x4, scoped, tag = 'scoped memory for tpu_custom_call.1']
    %9 = vsyncpa [#allocation4], 0
    // Predicated region
    $region2: #{tpu_custom_call.1} parent=1 // pred_check
      _
    $region3: #{tpu_custom_call.1} parent=1 // pred_check_branch
      %11 = sbr.rel (0) target = $region5
    $region4: #{tpu_custom_call.1} parent=1 // pred_region
      _
    $region5: #{tpu_custom_call.1} parent=1 // pred_fallthru
      _
    // Predicated region
    $region6: #{tpu_custom_call.1} parent=1 // pred_check
      _
    $region7: #{tpu_custom_call.1} parent=1 // pred_check_branch
      %13 = sbr.rel (0) target = $region9
    $region8: #{tpu_custom_call.1} parent=1 // pred_region
      _
    $region9: #{tpu_custom_call.1} parent=1 // pred_fallthru
      _
    // Predicated region
    $region10: #{tpu_custom_call.1} parent=1 // pred_check
      _
    $region11: #{tpu_custom_call.1} parent=1 // pred_check_branch
      %15 = sbr.rel (0) target = $region13
    $region12: #{tpu_custom_call.1} parent=1 // pred_region
      _
    $region13: #{tpu_custom_call.1} parent=1 // pred_fallthru
      _
    // Predicated region
    $region14: #{tpu_custom_call.1} parent=1 // pred_check
      _
    $region15: #{tpu_custom_call.1} parent=1 // pred_check_branch
      %17 = sbr.rel (0) target = $region17
    $region16: #{tpu_custom_call.1} parent=1 // pred_region
      _
    $region17: #{tpu_custom_call.1} parent=1 // pred_fallthru
      _
    %v19 = vld [vmem:[%s0] sm:$0xff]
    %v20 = vld [vmem:[%s0 + $0x8] sm:$0xff]
    %v21 = vld [vmem:[%s0 + $0x10] sm:$0xff]
    %v22 = vld [vmem:[%s0 + $0x18] sm:$0xff]
    %v23 = vld [vmem:[%s0 + $0x20] sm:$0xff]
    %v24 = vld [vmem:[%s0 + $0x28] sm:$0xff]
    %v25 = vld [vmem:[%s0 + $0x30] sm:$0xff]
    %v26 = vld [vmem:[%s0 + $0x38] sm:$0xff]
    %vm27 = vcmask 523264
    %v28 = vsel %vm27, %v19, 0.0
    %29 = vadd.xlane.f32.xlu0 %v28
    %v30 = vpop.xlane.xlu0 %29
    %v31 = vsel %vm27, %v20, 0.0
    %32 = vadd.xlane.f32.xlu0 %v31
    %v33 = vpop.xlane.xlu0 %32
    %v34 = vsel %vm27, %v21, 0.0
    %35 = vadd.xlane.f32.xlu0 %v34
    %v36 = vpop.xlane.xlu0 %35
    %v37 = vsel %vm27, %v22, 0.0
    %38 = vadd.xlane.f32.xlu0 %v37
    %v39 = vpop.xlane.xlu0 %38
    %v40 = vsel %vm27, %v23, 0.0
    %41 = vadd.xlane.f32.xlu0 %v40
    %v42 = vpop.xlane.xlu0 %41
    %v43 = vsel %vm27, %v24, 0.0
    %44 = vadd.xlane.f32.xlu0 %v43
    %v45 = vpop.xlane.xlu0 %44
    %v46 = vsel %vm27, %v25, 0.0
    %47 = vadd.xlane.f32.xlu0 %v46
    %v48 = vpop.xlane.xlu0 %47
    %v49 = vsel %vm27, %v26, 0.0
    %50 = vadd.xlane.f32.xlu0 %v49
    %v51 = vpop.xlane.xlu0 %50
    %v52 = vmax.f32 %v30, 1.0
    %v53 = vmax.f32 %v33, 1.0
    %v54 = vmax.f32 %v36, 1.0
    %v55 = vmax.f32 %v39, 1.0
    %v56 = vmax.f32 %v42, 1.0
    %v57 = vmax.f32 %v45, 1.0
    %v58 = vmax.f32 %v48, 1.0
    %v59 = vmax.f32 %v51, 1.0
    %v60 = vrcp.pop %v52
    %v61 = vmul.f32 %v52, %v60
    %v62 = vsub.f32 1.0, %v61
    %v63 = vmul.f32 %v60, %v62
    %v64 = vadd.f32 %v60, %v63
    %vm65 = vweird.f32 %v52
    %vm66 = vweird.f32 %v60
    %vm67 = vmor %vm65, %vm66
    %v68 = vsel %vm67, %v60, %v64
    %v69 = vand.u32 2147483647, %v52
    %vm70 = vcmp.eq.f32.partialorder %v69, 8.507059e+37
    %v71 = vand.u32 %v52, 2147483648
    %v72 = vor.u32 1.1754944e-38, %v71
    %v73 = vsel %vm70, %v72, %v68
    %v74 = vmul.f32 1.0, %v73
    %v75 = vrcp.pop %v53
    %v76 = vmul.f32 %v53, %v75
    %v77 = vsub.f32 1.0, %v76
    %v78 = vmul.f32 %v75, %v77
    %v79 = vadd.f32 %v75, %v78
    %vm80 = vweird.f32 %v53
    %vm81 = vweird.f32 %v75
    %vm82 = vmor %vm80, %vm81
    %v83 = vsel %vm82, %v75, %v79
    %v84 = vand.u32 2147483647, %v53
    %vm85 = vcmp.eq.f32.partialorder %v84, 8.507059e+37
    %v86 = vand.u32 %v53, 2147483648
    %v87 = vor.u32 1.1754944e-38, %v86
    %v88 = vsel %vm85, %v87, %v83
    %v89 = vmul.f32 1.0, %v88
    %v90 = vrcp.pop %v54
    %v91 = vmul.f32 %v54, %v90
    %v92 = vsub.f32 1.0, %v91
    %v93 = vmul.f32 %v90, %v92
    %v94 = vadd.f32 %v90, %v93
    %vm95 = vweird.f32 %v54
    %vm96 = vweird.f32 %v90
    %vm97 = vmor %vm95, %vm96
    %v98 = vsel %vm97, %v90, %v94
    %v99 = vand.u32 2147483647, %v54
    %vm100 = vcmp.eq.f32.partialorder %v99, 8.507059e+37
    %v101 = vand.u32 %v54, 2147483648
    %v102 = vor.u32 1.1754944e-38, %v101
    %v103 = vsel %vm100, %v102, %v98
    %v104 = vmul.f32 1.0, %v103
    %v105 = vrcp.pop %v55
    %v106 = vmul.f32 %v55, %v105
    %v107 = vsub.f32 1.0, %v106
    %v108 = vmul.f32 %v105, %v107
    %v109 = vadd.f32 %v105, %v108
    %vm110 = vweird.f32 %v55
    %vm111 = vweird.f32 %v105
    %vm112 = vmor %vm110, %vm111
    %v113 = vsel %vm112, %v105, %v109
    %v114 = vand.u32 2147483647, %v55
    %vm115 = vcmp.eq.f32.partialorder %v114, 8.507059e+37
    %v116 = vand.u32 %v55, 2147483648
    %v117 = vor.u32 1.1754944e-38, %v116
    %v118 = vsel %vm115, %v117, %v113
    %v119 = vmul.f32 1.0, %v118
    %v120 = vrcp.pop %v56
    %v121 = vmul.f32 %v56, %v120
    %v122 = vsub.f32 1.0, %v121
    %v123 = vmul.f32 %v120, %v122
    %v124 = vadd.f32 %v120, %v123
    %vm125 = vweird.f32 %v56
    %vm126 = vweird.f32 %v120
    %vm127 = vmor %vm125, %vm126
    %v128 = vsel %vm127, %v120, %v124
    %v129 = vand.u32 2147483647, %v56
    %vm130 = vcmp.eq.f32.partialorder %v129, 8.507059e+37
    %v131 = vand.u32 %v56, 2147483648
    %v132 = vor.u32 1.1754944e-38, %v131
    %v133 = vsel %vm130, %v132, %v128
    %v134 = vmul.f32 1.0, %v133
    %v135 = vrcp.pop %v57
    %v136 = vmul.f32 %v57, %v135
    %v137 = vsub.f32 1.0, %v136
    %v138 = vmul.f32 %v135, %v137
    %v139 = vadd.f32 %v135, %v138
    %vm140 = vweird.f32 %v57
    %vm141 = vweird.f32 %v135
    %vm142 = vmor %vm140, %vm141
    %v143 = vsel %vm142, %v135, %v139
    %v144 = vand.u32 2147483647, %v57
    %vm145 = vcmp.eq.f32.partialorder %v144, 8.507059e+37
    %v146 = vand.u32 %v57, 2147483648
    %v147 = vor.u32 1.1754944e-38, %v146
    %v148 = vsel %vm145, %v147, %v143
    %v149 = vmul.f32 1.0, %v148
    %v150 = vrcp.pop %v58
    %v151 = vmul.f32 %v58, %v150
    %v152 = vsub.f32 1.0, %v151
    %v153 = vmul.f32 %v150, %v152
    %v154 = vadd.f32 %v150, %v153
    %vm155 = vweird.f32 %v58
    %vm156 = vweird.f32 %v150
    %vm157 = vmor %vm155, %vm156
    %v158 = vsel %vm157, %v150, %v154
    %v159 = vand.u32 2147483647, %v58
    %vm160 = vcmp.eq.f32.partialorder %v159, 8.507059e+37
    %v161 = vand.u32 %v58, 2147483648
    %v162 = vor.u32 1.1754944e-38, %v161
    %v163 = vsel %vm160, %v162, %v158
    %v164 = vmul.f32 1.0, %v163
    %v165 = vrcp.pop %v59
    %v166 = vmul.f32 %v59, %v165
    %v167 = vsub.f32 1.0, %v166
    %v168 = vmul.f32 %v165, %v167
    %v169 = vadd.f32 %v165, %v168
    %vm170 = vweird.f32 %v59
    %vm171 = vweird.f32 %v165
    %vm172 = vmor %vm170, %vm171
    %v173 = vsel %vm172, %v165, %v169
    %v174 = vand.u32 2147483647, %v59
    %vm175 = vcmp.eq.f32.partialorder %v174, 8.507059e+37
    %v176 = vand.u32 %v59, 2147483648
    %v177 = vor.u32 1.1754944e-38, %v176
    %v178 = vsel %vm175, %v177, %v173
    %v179 = vmul.f32 1.0, %v178
    %v180 = vrsqrt.pop %v52
    %v181 = vmul.f32 %v180, %v52
    %v182 = vmul.f32 %v181, %v180
    %v183 = vmul.f32 0.5, %v182
    %v184 = vsub.f32 1.5, %v183
    %v185 = vmul.f32 %v180, %v184
    %vm186 = vweird.f32 %v52
    %vm187 = vweird.f32 %v180
    %vm188 = vmor %vm186, %vm187
    %v189 = vsel %vm188, %v180, %v185
    %v190 = vrsqrt.pop %v53
    %v191 = vmul.f32 %v190, %v53
    %v192 = vmul.f32 %v191, %v190
    %v193 = vmul.f32 0.5, %v192
    %v194 = vsub.f32 1.5, %v193
    %v195 = vmul.f32 %v190, %v194
    %vm196 = vweird.f32 %v53
    %vm197 = vweird.f32 %v190
    %vm198 = vmor %vm196, %vm197
    %v199 = vsel %vm198, %v190, %v195
    %v200 = vrsqrt.pop %v54
    %v201 = vmul.f32 %v200, %v54
    %v202 = vmul.f32 %v201, %v200
    %v203 = vmul.f32 0.5, %v202
    %v204 = vsub.f32 1.5, %v203
    %v205 = vmul.f32 %v200, %v204
    %vm206 = vweird.f32 %v54
    %vm207 = vweird.f32 %v200
    %vm208 = vmor %vm206, %vm207
    %v209 = vsel %vm208, %v200, %v205
    %v210 = vrsqrt.pop %v55
    %v211 = vmul.f32 %v210, %v55
    %v212 = vmul.f32 %v211, %v210
    %v213 = vmul.f32 0.5, %v212
    %v214 = vsub.f32 1.5, %v213
    %v215 = vmul.f32 %v210, %v214
    %vm216 = vweird.f32 %v55
    %vm217 = vweird.f32 %v210
    %vm218 = vmor %vm216, %vm217
    %v219 = vsel %vm218, %v210, %v215
    %v220 = vrsqrt.pop %v56
    %v221 = vmul.f32 %v220, %v56
    %v222 = vmul.f32 %v221, %v220
    %v223 = vmul.f32 0.5, %v222
    %v224 = vsub.f32 1.5, %v223
    %v225 = vmul.f32 %v220, %v224
    %vm226 = vweird.f32 %v56
    %vm227 = vweird.f32 %v220
    %vm228 = vmor %vm226, %vm227
    %v229 = vsel %vm228, %v220, %v225
    %v230 = vrsqrt.pop %v57
    %v231 = vmul.f32 %v230, %v57
    %v232 = vmul.f32 %v231, %v230
    %v233 = vmul.f32 0.5, %v232
    %v234 = vsub.f32 1.5, %v233
    %v235 = vmul.f32 %v230, %v234
    %vm236 = vweird.f32 %v57
    %vm237 = vweird.f32 %v230
    %vm238 = vmor %vm236, %vm237
    %v239 = vsel %vm238, %v230, %v235
    %v240 = vrsqrt.pop %v58
    %v241 = vmul.f32 %v240, %v58
    %v242 = vmul.f32 %v241, %v240
    %v243 = vmul.f32 0.5, %v242
    %v244 = vsub.f32 1.5, %v243
    %v245 = vmul.f32 %v240, %v244
    %vm246 = vweird.f32 %v58
    %vm247 = vweird.f32 %v240
    %vm248 = vmor %vm246, %vm247
    %v249 = vsel %vm248, %v240, %v245
    %v250 = vrsqrt.pop %v59
    %v251 = vmul.f32 %v250, %v59
    %v252 = vmul.f32 %v251, %v250
    %v253 = vmul.f32 0.5, %v252
    %v254 = vsub.f32 1.5, %v253
    %v255 = vmul.f32 %v250, %v254
    %vm256 = vweird.f32 %v59
    %vm257 = vweird.f32 %v250
    %vm258 = vmor %vm256, %vm257
    %v259 = vsel %vm258, %v250, %v255
    %v260 = vmul.f32 %v52, %v189
    %v261 = vmul.f32 %v53, %v199
    %v262 = vmul.f32 %v54, %v209
    %v263 = vmul.f32 %v55, %v219
    %v264 = vmul.f32 %v56, %v229
    %v265 = vmul.f32 %v57, %v239
    %v266 = vmul.f32 %v58, %v249
    %v267 = vmul.f32 %v59, %v259
    %v268 = vmul.f32 %v74, %v19
    %v269 = vmul.f32 %v89, %v20
    %v270 = vmul.f32 %v104, %v21
    %v271 = vmul.f32 %v119, %v22
    %v272 = vmul.f32 %v134, %v23
    %v273 = vmul.f32 %v149, %v24
    %v274 = vmul.f32 %v164, %v25
    %v275 = vmul.f32 %v179, %v26
    %v276 = vpack.c.bf16 %v268, %v268
    %v277 = vpack.c.bf16 %v269, %v269
    %v278 = vpack.c.bf16 %v270, %v270
    %v279 = vpack.c.bf16 %v271, %v271
    %v280 = vpack.c.bf16 %v272, %v272
    %v281 = vpack.c.bf16 %v273, %v273
    %v282 = vpack.c.bf16 %v274, %v274
    %v283 = vpack.c.bf16 %v275, %v275
    %vm284 = vcmask 519168
    %285 = vst.msk [vmem:[#allocation2] sm:$0xf] %vm284, %v276
    %286 = vst.msk [vmem:[#allocation2 + $0x4] sm:$0xf] %vm284, %v277
    %287 = vst.msk [vmem:[#allocation2 + $0x8] sm:$0xf] %vm284, %v278
    %288 = vst.msk [vmem:[#allocation2 + $0xc] sm:$0xf] %vm284, %v279
    %289 = vst.msk [vmem:[#allocation2 + $0x10] sm:$0xf] %vm284, %v280
    %290 = vst.msk [vmem:[#allocation2 + $0x14] sm:$0xf] %vm284, %v281
    %291 = vst.msk [vmem:[#allocation2 + $0x18] sm:$0xf] %vm284, %v282
    %292 = vst.msk [vmem:[#allocation2 + $0x1c] sm:$0xf] %vm284, %v283
    %v293 = vld [vmem:[#allocation2] sm:$0xf]
    %v294 = vld [vmem:[#allocation2 + $0x4] sm:$0xf]
    %v295 = vld [vmem:[#allocation2 + $0x8] sm:$0xf]
    %v296 = vld [vmem:[#allocation2 + $0xc] sm:$0xf]
    %v297 = vld [vmem:[#allocation2 + $0x10] sm:$0xf]
    %v298 = vld [vmem:[#allocation2 + $0x14] sm:$0xf]
    %v299 = vld [vmem:[#allocation2 + $0x18] sm:$0xf]
    %v300 = vld [vmem:[#allocation2 + $0x1c] sm:$0xf]
    %v301 = vld [vmem:[%s1] sm:$0xff]
    %v302 = vld [vmem:[%s1 + $0x8] sm:$0xff]
    %v303 = vld [vmem:[%s1 + $0x10] sm:$0xff]
    %v304 = vld [vmem:[%s1 + $0x18] sm:$0xff]
    %v305 = vld [vmem:[%s1 + $0x20] sm:$0xff]
    %v306 = vld [vmem:[%s1 + $0x28] sm:$0xff]
    %v307 = vld [vmem:[%s1 + $0x30] sm:$0xff]
    %v308 = vld [vmem:[%s1 + $0x38] sm:$0xff]
    %v309 = vld [vmem:[%s2] sm:$0xff]
    %v310 = vld [vmem:[%s2 + $0x8] sm:$0xff]
    %v311 = vld [vmem:[%s2 + $0x10] sm:$0xff]
    %v312 = vld [vmem:[%s2 + $0x18] sm:$0xff]
    %vm313 = vcmask 261120
    %v315 = vsel %vm313, %v301, 0
    %v318 = vsel %vm313, %v302, 0
    %v321 = vsel %vm313, %v303, 0
    %v324 = vsel %vm313, %v304, 0
    %v327 = vsel %vm313, %v305, 0
    %v330 = vsel %vm313, %v306, 0
    %v333 = vsel %vm313, %v307, 0
    %v336 = vsel %vm313, %v308, 0
    %338 = vmatpush.msra.mxu0 0.0
    %339 = vmatpush.msra.mxu0 0.0
    %340 = vmatpush.msra.mxu0 0.0
    %341 = vmatpush.msra.mxu0 0.0
    %342 = vmatpush.msra.mxu0 0.0
    %343 = vmatpush.msra.mxu0 0.0
    %344 = vmatpush.msra.mxu0 0.0
    %345 = vmatpush.msra.mxu0 0.0
    %346 = vmatpush.msra.mxu0 0.0
    %347 = vmatpush.msra.mxu0 0.0
    %348 = vmatpush.msra.mxu0 0.0
    %349 = vmatpush.msra.mxu0 0.0
    %350 = vmatpush.msra.mxu0 %v312
    %351 = vmatpush.msra.mxu0 %v311
    %352 = vmatpush.msra.mxu0 %v310
    %353 = vmatpush.msra.mxu0 %v309
    %354 = vmatmul.f32.gmra.mxu0 %v315
    %v355 = vpop.f32.mrf.mxu0
    %v356 = vadd.f32 0.0, %v355
    %357 = vmatmul.f32.gmra.mxu0 %v318
    %v358 = vpop.f32.mrf.mxu0
    %v359 = vadd.f32 0.0, %v358
    %360 = vmatmul.f32.gmra.mxu0 %v321
    %v361 = vpop.f32.mrf.mxu0
    %v362 = vadd.f32 0.0, %v361
    %363 = vmatmul.f32.gmra.mxu0 %v324
    %v364 = vpop.f32.mrf.mxu0
    %v365 = vadd.f32 0.0, %v364
    %366 = vmatmul.f32.gmra.mxu0 %v327
    %v367 = vpop.f32.mrf.mxu0
    %v368 = vadd.f32 0.0, %v367
    %369 = vmatmul.f32.gmra.mxu0 %v330
    %v370 = vpop.f32.mrf.mxu0
    %v371 = vadd.f32 0.0, %v370
    %372 = vmatmul.f32.gmra.mxu0 %v333
    %v373 = vpop.f32.mrf.mxu0
    %v374 = vadd.f32 0.0, %v373
    %375 = vmatmul.f32.gmra.mxu0 %v336
    %v376 = vpop.f32.mrf.mxu0
    %v377 = vadd.f32 0.0, %v376
    %378 = vdwg.mxu0
    %v379 = vmul.f32 %v189, %v356
    %v380 = vmul.f32 %v199, %v359
    %v381 = vmul.f32 %v209, %v362
    %v382 = vmul.f32 %v219, %v365
    %v383 = vmul.f32 %v229, %v368
    %v384 = vmul.f32 %v239, %v371
    %v385 = vmul.f32 %v249, %v374
    %v386 = vmul.f32 %v259, %v377
    %v387 = vmul.f32 %v379, 0.36787945
    %v388 = vmul.f32 %v380, 0.36787945
    %v389 = vmul.f32 %v381, 0.36787945
    %v390 = vmul.f32 %v382, 0.36787945
    %v391 = vmul.f32 %v383, 0.36787945
    %v392 = vmul.f32 %v384, 0.36787945
    %v393 = vmul.f32 %v385, 0.36787945
    %v394 = vmul.f32 %v386, 0.36787945
    %v395 = vpack.c.bf16 %v380, %v379
    %v396 = vpack.c.bf16 %v382, %v381
    %v397 = vpack.c.bf16 %v384, %v383
    %v398 = vpack.c.bf16 %v386, %v385
    %v407 = vunpack.c.l.b16 %v293
    %v408 = vunpack.c.l.b16 %v294
    %v409 = vunpack.c.l.b16 %v295
    %v410 = vunpack.c.l.b16 %v296
    %v411 = vunpack.c.l.b16 %v297
    %v412 = vunpack.c.l.b16 %v298
    %v413 = vunpack.c.l.b16 %v299
    %v414 = vunpack.c.l.b16 %v300
    %v415 = vpack.c.b16 %v408, %v407
    %v416 = vpack.c.b16 %v410, %v409
    %v417 = vpack.c.b16 %v412, %v411
    %v418 = vpack.c.b16 %v414, %v413
    %v420 = vsel %vm27, %v415, 0
    %v423 = vsel %vm27, %v416, 0
    %v426 = vsel %vm27, %v417, 0
    %v429 = vsel %vm27, %v418, 0
    %431 = vmatpush.bf16.msra.mxu0 0
    %432 = vmatpush.bf16.msra.mxu0 0
    %433 = vmatpush.bf16.msra.mxu0 0
    %434 = vmatpush.bf16.msra.mxu0 0
    %435 = vmatpush.bf16.msra.mxu0 %v398
    %436 = vmatpush.bf16.msra.mxu0 %v397
    %437 = vmatpush.bf16.msra.mxu0 %v396
    %438 = vmatpush.bf16.msra.mxu0 %v395
    %439 = vmatmul.bf16.gmra.mxu0 %v420
    %v440 = vpop.f32.mrf.mxu0
    %v441 = vadd.f32 0.0, %v440
    %v442 = vpop.f32.mrf.mxu0
    %v443 = vadd.f32 0.0, %v442
    %444 = vmatmul.bf16.gmra.mxu0 %v423
    %v445 = vpop.f32.mrf.mxu0
    %v446 = vadd.f32 0.0, %v445
    %v447 = vpop.f32.mrf.mxu0
    %v448 = vadd.f32 0.0, %v447
    %449 = vmatmul.bf16.gmra.mxu0 %v426
    %v450 = vpop.f32.mrf.mxu0
    %v451 = vadd.f32 0.0, %v450
    %v452 = vpop.f32.mrf.mxu0
    %v453 = vadd.f32 0.0, %v452
    %454 = vmatmul.bf16.gmra.mxu0 %v429
    %v455 = vpop.f32.mrf.mxu0
    %v456 = vadd.f32 0.0, %v455
    %v457 = vpop.f32.mrf.mxu0
    %v458 = vadd.f32 0.0, %v457
    %459 = vdwg.mxu0
    %v460 = vmul.f32 %v441, 0.36787945
    %v461 = vmul.f32 %v443, 0.36787945
    %v462 = vmul.f32 %v446, 0.36787945
    %v463 = vmul.f32 %v448, 0.36787945
    %v464 = vmul.f32 %v451, 0.36787945
    %v465 = vmul.f32 %v453, 0.36787945
    %v466 = vmul.f32 %v456, 0.36787945
    %v467 = vmul.f32 %v458, 0.36787945
    %v468 = vadd.f32 %v387, %v460
    %v469 = vadd.f32 %v388, %v461
    %v470 = vadd.f32 %v389, %v462
    %v471 = vadd.f32 %v390, %v463
    %v472 = vadd.f32 %v391, %v464
    %v473 = vadd.f32 %v392, %v465
    %v474 = vadd.f32 %v393, %v466
    %v475 = vadd.f32 %v394, %v467
    %v476 = vpack.c.bf16 %v443, %v441
    %v477 = vpack.c.bf16 %v448, %v446
    %v478 = vpack.c.bf16 %v453, %v451
    %v479 = vpack.c.bf16 %v458, %v456
    %480 = vmatpush.bf16.msra.mxu0 0
    %481 = vmatpush.bf16.msra.mxu0 0
    %482 = vmatpush.bf16.msra.mxu0 0
    %483 = vmatpush.bf16.msra.mxu0 0
    %484 = vmatpush.bf16.msra.mxu0 %v479
    %485 = vmatpush.bf16.msra.mxu0 %v478
    %486 = vmatpush.bf16.msra.mxu0 %v477
    %487 = vmatpush.bf16.msra.mxu0 %v476
    %488 = vmatmul.bf16.gmra.mxu0 %v420
    %v489 = vpop.f32.mrf.mxu0
    %v490 = vadd.f32 0.0, %v489
    %v491 = vpop.f32.mrf.mxu0
    %v492 = vadd.f32 0.0, %v491
    %493 = vmatmul.bf16.gmra.mxu0 %v423
    %v494 = vpop.f32.mrf.mxu0
    %v495 = vadd.f32 0.0, %v494
    %v496 = vpop.f32.mrf.mxu0
    %v497 = vadd.f32 0.0, %v496
    %498 = vmatmul.bf16.gmra.mxu0 %v426
    %v499 = vpop.f32.mrf.mxu0
    %v500 = vadd.f32 0.0, %v499
    %v501 = vpop.f32.mrf.mxu0
    %v502 = vadd.f32 0.0, %v501
    %503 = vmatmul.bf16.gmra.mxu0 %v429
    %v504 = vpop.f32.mrf.mxu0
    %v505 = vadd.f32 0.0, %v504
    %v506 = vpop.f32.mrf.mxu0
    %v507 = vadd.f32 0.0, %v506
    %508 = vdwg.mxu0
    %v509 = vmul.f32 %v490, 0.18393973
    %v510 = vmul.f32 %v492, 0.18393973
    %v511 = vmul.f32 %v495, 0.18393973
    %v512 = vmul.f32 %v497, 0.18393973
    %v513 = vmul.f32 %v500, 0.18393973
    %v514 = vmul.f32 %v502, 0.18393973
    %v515 = vmul.f32 %v505, 0.18393973
    %v516 = vmul.f32 %v507, 0.18393973
    %v517 = vadd.f32 %v468, %v509
    %v518 = vadd.f32 %v469, %v510
    %v519 = vadd.f32 %v470, %v511
    %v520 = vadd.f32 %v471, %v512
    %v521 = vadd.f32 %v472, %v513
    %v522 = vadd.f32 %v473, %v514
    %v523 = vadd.f32 %v474, %v515
    %v524 = vadd.f32 %v475, %v516
    %v525 = vpack.c.bf16 %v492, %v490
    %v526 = vpack.c.bf16 %v497, %v495
    %v527 = vpack.c.bf16 %v502, %v500
    %v528 = vpack.c.bf16 %v507, %v505
    %529 = vmatpush.bf16.msra.mxu0 0
    %530 = vmatpush.bf16.msra.mxu0 0
    %531 = vmatpush.bf16.msra.mxu0 0
    %532 = vmatpush.bf16.msra.mxu0 0
    %533 = vmatpush.bf16.msra.mxu0 %v528
    %534 = vmatpush.bf16.msra.mxu0 %v527
    %535 = vmatpush.bf16.msra.mxu0 %v526
    %536 = vmatpush.bf16.msra.mxu0 %v525
    %537 = vmatmul.bf16.gmra.mxu0 %v420
    %v538 = vpop.f32.mrf.mxu0
    %v539 = vadd.f32 0.0, %v538
    %v540 = vpop.f32.mrf.mxu0
    %v541 = vadd.f32 0.0, %v540
    %542 = vmatmul.bf16.gmra.mxu0 %v423
    %v543 = vpop.f32.mrf.mxu0
    %v544 = vadd.f32 0.0, %v543
    %v545 = vpop.f32.mrf.mxu0
    %v546 = vadd.f32 0.0, %v545
    %547 = vmatmul.bf16.gmra.mxu0 %v426
    %v548 = vpop.f32.mrf.mxu0
    %v549 = vadd.f32 0.0, %v548
    %v550 = vpop.f32.mrf.mxu0
    %v551 = vadd.f32 0.0, %v550
    %552 = vmatmul.bf16.gmra.mxu0 %v429
    %v553 = vpop.f32.mrf.mxu0
    %v554 = vadd.f32 0.0, %v553
    %v555 = vpop.f32.mrf.mxu0
    %v556 = vadd.f32 0.0, %v555
    %557 = vdwg.mxu0
    %v558 = vmul.f32 %v539, 0.06131324
    %v559 = vmul.f32 %v541, 0.06131324
    %v560 = vmul.f32 %v544, 0.06131324
    %v561 = vmul.f32 %v546, 0.06131324
    %v562 = vmul.f32 %v549, 0.06131324
    %v563 = vmul.f32 %v551, 0.06131324
    %v564 = vmul.f32 %v554, 0.06131324
    %v565 = vmul.f32 %v556, 0.06131324
    %v566 = vadd.f32 %v517, %v558
    %v567 = vadd.f32 %v518, %v559
    %v568 = vadd.f32 %v519, %v560
    %v569 = vadd.f32 %v520, %v561
    %v570 = vadd.f32 %v521, %v562
    %v571 = vadd.f32 %v522, %v563
    %v572 = vadd.f32 %v523, %v564
    %v573 = vadd.f32 %v524, %v565
    %v574 = vpack.c.bf16 %v541, %v539
    %v575 = vpack.c.bf16 %v546, %v544
    %v576 = vpack.c.bf16 %v551, %v549
    %v577 = vpack.c.bf16 %v556, %v554
    %578 = vmatpush.bf16.msra.mxu0 0
    %579 = vmatpush.bf16.msra.mxu0 0
    %580 = vmatpush.bf16.msra.mxu0 0
    %581 = vmatpush.bf16.msra.mxu0 0
    %582 = vmatpush.bf16.msra.mxu0 %v577
    %583 = vmatpush.bf16.msra.mxu0 %v576
    %584 = vmatpush.bf16.msra.mxu0 %v575
    %585 = vmatpush.bf16.msra.mxu0 %v574
    %586 = vmatmul.bf16.gmra.mxu0 %v420
    %v587 = vpop.f32.mrf.mxu0
    %v588 = vadd.f32 0.0, %v587
    %v589 = vpop.f32.mrf.mxu0
    %v590 = vadd.f32 0.0, %v589
    %591 = vmatmul.bf16.gmra.mxu0 %v423
    %v592 = vpop.f32.mrf.mxu0
    %v593 = vadd.f32 0.0, %v592
    %v594 = vpop.f32.mrf.mxu0
    %v595 = vadd.f32 0.0, %v594
    %596 = vmatmul.bf16.gmra.mxu0 %v426
    %v597 = vpop.f32.mrf.mxu0
    %v598 = vadd.f32 0.0, %v597
    %v599 = vpop.f32.mrf.mxu0
    %v600 = vadd.f32 0.0, %v599
    %601 = vmatmul.bf16.gmra.mxu0 %v429
    %v602 = vpop.f32.mrf.mxu0
    %v603 = vadd.f32 0.0, %v602
    %v604 = vpop.f32.mrf.mxu0
    %v605 = vadd.f32 0.0, %v604
    %606 = vdwg.mxu0
    %v607 = vmul.f32 %v588, 0.01532831
    %v608 = vmul.f32 %v590, 0.01532831
    %v609 = vmul.f32 %v593, 0.01532831
    %v610 = vmul.f32 %v595, 0.01532831
    %v611 = vmul.f32 %v598, 0.01532831
    %v612 = vmul.f32 %v600, 0.01532831
    %v613 = vmul.f32 %v603, 0.01532831
    %v614 = vmul.f32 %v605, 0.01532831
    %v615 = vadd.f32 %v566, %v607
    %v616 = vadd.f32 %v567, %v608
    %v617 = vadd.f32 %v568, %v609
    %v618 = vadd.f32 %v569, %v610
    %v619 = vadd.f32 %v570, %v611
    %v620 = vadd.f32 %v571, %v612
    %v621 = vadd.f32 %v572, %v613
    %v622 = vadd.f32 %v573, %v614
    %v623 = vpack.c.bf16 %v590, %v588
    %v624 = vpack.c.bf16 %v595, %v593
    %v625 = vpack.c.bf16 %v600, %v598
    %v626 = vpack.c.bf16 %v605, %v603
    %627 = vmatpush.bf16.msra.mxu0 0
    %628 = vmatpush.bf16.msra.mxu0 0
    %629 = vmatpush.bf16.msra.mxu0 0
    %630 = vmatpush.bf16.msra.mxu0 0
    %631 = vmatpush.bf16.msra.mxu0 %v626
    %632 = vmatpush.bf16.msra.mxu0 %v625
    %633 = vmatpush.bf16.msra.mxu0 %v624
    %634 = vmatpush.bf16.msra.mxu0 %v623
    %635 = vmatmul.bf16.gmra.mxu0 %v420
    %v636 = vpop.f32.mrf.mxu0
    %v637 = vadd.f32 0.0, %v636
    %v638 = vpop.f32.mrf.mxu0
    %v639 = vadd.f32 0.0, %v638
    %640 = vmatmul.bf16.gmra.mxu0 %v423
    %v641 = vpop.f32.mrf.mxu0
    %v642 = vadd.f32 0.0, %v641
    %v643 = vpop.f32.mrf.mxu0
    %v644 = vadd.f32 0.0, %v643
    %645 = vmatmul.bf16.gmra.mxu0 %v426
    %v646 = vpop.f32.mrf.mxu0
    %v647 = vadd.f32 0.0, %v646
    %v648 = vpop.f32.mrf.mxu0
    %v649 = vadd.f32 0.0, %v648
    %650 = vmatmul.bf16.gmra.mxu0 %v429
    %v651 = vpop.f32.mrf.mxu0
    %v652 = vadd.f32 0.0, %v651
    %v653 = vpop.f32.mrf.mxu0
    %v654 = vadd.f32 0.0, %v653
    %655 = vdwg.mxu0
    %v656 = vmul.f32 %v637, 0.003065662
    %v657 = vmul.f32 %v639, 0.003065662
    %v658 = vmul.f32 %v642, 0.003065662
    %v659 = vmul.f32 %v644, 0.003065662
    %v660 = vmul.f32 %v647, 0.003065662
    %v661 = vmul.f32 %v649, 0.003065662
    %v662 = vmul.f32 %v652, 0.003065662
    %v663 = vmul.f32 %v654, 0.003065662
    %v664 = vadd.f32 %v615, %v656
    %v665 = vadd.f32 %v616, %v657
    %v666 = vadd.f32 %v617, %v658
    %v667 = vadd.f32 %v618, %v659
    %v668 = vadd.f32 %v619, %v660
    %v669 = vadd.f32 %v620, %v661
    %v670 = vadd.f32 %v621, %v662
    %v671 = vadd.f32 %v622, %v663
    %v672 = vpack.c.bf16 %v639, %v637
    %v673 = vpack.c.bf16 %v644, %v642
    %v674 = vpack.c.bf16 %v649, %v647
    %v675 = vpack.c.bf16 %v654, %v652
    %676 = vmatpush.bf16.msra.mxu0 0
    %677 = vmatpush.bf16.msra.mxu0 0
    %678 = vmatpush.bf16.msra.mxu0 0
    %679 = vmatpush.bf16.msra.mxu0 0
    %680 = vmatpush.bf16.msra.mxu0 %v675
    %681 = vmatpush.bf16.msra.mxu0 %v674
    %682 = vmatpush.bf16.msra.mxu0 %v673
    %683 = vmatpush.bf16.msra.mxu0 %v672
    %684 = vmatmul.bf16.gmra.mxu0 %v420
    %v685 = vpop.f32.mrf.mxu0
    %v686 = vadd.f32 0.0, %v685
    %v687 = vpop.f32.mrf.mxu0
    %v688 = vadd.f32 0.0, %v687
    %689 = vmatmul.bf16.gmra.mxu0 %v423
    %v690 = vpop.f32.mrf.mxu0
    %v691 = vadd.f32 0.0, %v690
    %v692 = vpop.f32.mrf.mxu0
    %v693 = vadd.f32 0.0, %v692
    %694 = vmatmul.bf16.gmra.mxu0 %v426
    %v695 = vpop.f32.mrf.mxu0
    %v696 = vadd.f32 0.0, %v695
    %v697 = vpop.f32.mrf.mxu0
    %v698 = vadd.f32 0.0, %v697
    %699 = vmatmul.bf16.gmra.mxu0 %v429
    %v700 = vpop.f32.mrf.mxu0
    %v701 = vadd.f32 0.0, %v700
    %v702 = vpop.f32.mrf.mxu0
    %v703 = vadd.f32 0.0, %v702
    %704 = vdwg.mxu0
    %v705 = vmul.f32 %v686, 0.00051094365
    %v706 = vmul.f32 %v688, 0.00051094365
    %v707 = vmul.f32 %v691, 0.00051094365
    %v708 = vmul.f32 %v693, 0.00051094365
    %v709 = vmul.f32 %v696, 0.00051094365
    %v710 = vmul.f32 %v698, 0.00051094365
    %v711 = vmul.f32 %v701, 0.00051094365
    %v712 = vmul.f32 %v703, 0.00051094365
    %v713 = vadd.f32 %v664, %v705
    %v714 = vadd.f32 %v665, %v706
    %v715 = vadd.f32 %v666, %v707
    %v716 = vadd.f32 %v667, %v708
    %v717 = vadd.f32 %v668, %v709
    %v718 = vadd.f32 %v669, %v710
    %v719 = vadd.f32 %v670, %v711
    %v720 = vadd.f32 %v671, %v712
    %v721 = vpack.c.bf16 %v688, %v686
    %v722 = vpack.c.bf16 %v693, %v691
    %v723 = vpack.c.bf16 %v698, %v696
    %v724 = vpack.c.bf16 %v703, %v701
    %725 = vmatpush.bf16.msra.mxu0 0
    %726 = vmatpush.bf16.msra.mxu0 0
    %727 = vmatpush.bf16.msra.mxu0 0
    %728 = vmatpush.bf16.msra.mxu0 0
    %729 = vmatpush.bf16.msra.mxu0 %v724
    %730 = vmatpush.bf16.msra.mxu0 %v723
    %731 = vmatpush.bf16.msra.mxu0 %v722
    %732 = vmatpush.bf16.msra.mxu0 %v721
    %733 = vmatmul.bf16.gmra.mxu0 %v420
    %v734 = vpop.f32.mrf.mxu0
    %v735 = vadd.f32 0.0, %v734
    %v736 = vpop.f32.mrf.mxu0
    %v737 = vadd.f32 0.0, %v736
    %738 = vmatmul.bf16.gmra.mxu0 %v423
    %v739 = vpop.f32.mrf.mxu0
    %v740 = vadd.f32 0.0, %v739
    %v741 = vpop.f32.mrf.mxu0
    %v742 = vadd.f32 0.0, %v741
    %743 = vmatmul.bf16.gmra.mxu0 %v426
    %v744 = vpop.f32.mrf.mxu0
    %v745 = vadd.f32 0.0, %v744
    %v746 = vpop.f32.mrf.mxu0
    %v747 = vadd.f32 0.0, %v746
    %748 = vmatmul.bf16.gmra.mxu0 %v429
    %v749 = vpop.f32.mrf.mxu0
    %v750 = vadd.f32 0.0, %v749
    %v751 = vpop.f32.mrf.mxu0
    %v752 = vadd.f32 0.0, %v751
    %753 = vdwg.mxu0
    %v754 = vmul.f32 %v735, 7.2991956e-05
    %v755 = vmul.f32 %v737, 7.2991956e-05
    %v756 = vmul.f32 %v740, 7.2991956e-05
    %v757 = vmul.f32 %v742, 7.2991956e-05
    %v758 = vmul.f32 %v745, 7.2991956e-05
    %v759 = vmul.f32 %v747, 7.2991956e-05
    %v760 = vmul.f32 %v750, 7.2991956e-05
    %v761 = vmul.f32 %v752, 7.2991956e-05
    %v762 = vadd.f32 %v713, %v754
    %v763 = vadd.f32 %v714, %v755
    %v764 = vadd.f32 %v715, %v756
    %v765 = vadd.f32 %v716, %v757
    %v766 = vadd.f32 %v717, %v758
    %v767 = vadd.f32 %v718, %v759
    %v768 = vadd.f32 %v719, %v760
    %v769 = vadd.f32 %v720, %v761
    %v770 = vpack.c.bf16 %v737, %v735
    %v771 = vpack.c.bf16 %v742, %v740
    %v772 = vpack.c.bf16 %v747, %v745
    %v773 = vpack.c.bf16 %v752, %v750
    %774 = vmatpush.bf16.msra.mxu0 0
    %775 = vmatpush.bf16.msra.mxu0 0
    %776 = vmatpush.bf16.msra.mxu0 0
    %777 = vmatpush.bf16.msra.mxu0 0
    %778 = vmatpush.bf16.msra.mxu0 %v773
    %779 = vmatpush.bf16.msra.mxu0 %v772
    %780 = vmatpush.bf16.msra.mxu0 %v771
    %781 = vmatpush.bf16.msra.mxu0 %v770
    %782 = vmatmul.bf16.gmra.mxu0 %v420
    %v783 = vpop.f32.mrf.mxu0
    %v784 = vadd.f32 0.0, %v783
    %v785 = vpop.f32.mrf.mxu0
    %v786 = vadd.f32 0.0, %v785
    %787 = vmatmul.bf16.gmra.mxu0 %v423
    %v788 = vpop.f32.mrf.mxu0
    %v789 = vadd.f32 0.0, %v788
    %v790 = vpop.f32.mrf.mxu0
    %v791 = vadd.f32 0.0, %v790
    %792 = vmatmul.bf16.gmra.mxu0 %v426
    %v793 = vpop.f32.mrf.mxu0
    %v794 = vadd.f32 0.0, %v793
    %v795 = vpop.f32.mrf.mxu0
    %v796 = vadd.f32 0.0, %v795
    %797 = vmatmul.bf16.gmra.mxu0 %v429
    %v798 = vpop.f32.mrf.mxu0
    %v799 = vadd.f32 0.0, %v798
    %v800 = vpop.f32.mrf.mxu0
    %v801 = vadd.f32 0.0, %v800
    %802 = vdwg.mxu0
    %v803 = vmul.f32 %v784, 9.1239945e-06
    %v804 = vmul.f32 %v786, 9.1239945e-06
    %v805 = vmul.f32 %v789, 9.1239945e-06
    %v806 = vmul.f32 %v791, 9.1239945e-06
    %v807 = vmul.f32 %v794, 9.1239945e-06
    %v808 = vmul.f32 %v796, 9.1239945e-06
    %v809 = vmul.f32 %v799, 9.1239945e-06
    %v810 = vmul.f32 %v801, 9.1239945e-06
    %v811 = vadd.f32 %v762, %v803
    %v812 = vadd.f32 %v763, %v804
    %v813 = vadd.f32 %v764, %v805
    %v814 = vadd.f32 %v765, %v806
    %v815 = vadd.f32 %v766, %v807
    %v816 = vadd.f32 %v767, %v808
    %v817 = vadd.f32 %v768, %v809
    %v818 = vadd.f32 %v769, %v810
    %v819 = vpack.c.bf16 %v786, %v784
    %v820 = vpack.c.bf16 %v791, %v789
    %v821 = vpack.c.bf16 %v796, %v794
    %v822 = vpack.c.bf16 %v801, %v799
    %823 = vmatpush.bf16.msra.mxu0 0
    %824 = vmatpush.bf16.msra.mxu0 0
    %825 = vmatpush.bf16.msra.mxu0 0
    %826 = vmatpush.bf16.msra.mxu0 0
    %827 = vmatpush.bf16.msra.mxu0 %v822
    %828 = vmatpush.bf16.msra.mxu0 %v821
    %829 = vmatpush.bf16.msra.mxu0 %v820
    %830 = vmatpush.bf16.msra.mxu0 %v819
    %831 = vmatmul.bf16.gmra.mxu0 %v420
    %v832 = vpop.f32.mrf.mxu0
    %v833 = vadd.f32 0.0, %v832
    %v834 = vpop.f32.mrf.mxu0
    %v835 = vadd.f32 0.0, %v834
    %836 = vmatmul.bf16.gmra.mxu0 %v423
    %v837 = vpop.f32.mrf.mxu0
    %v838 = vadd.f32 0.0, %v837
    %v839 = vpop.f32.mrf.mxu0
    %v840 = vadd.f32 0.0, %v839
    %841 = vmatmul.bf16.gmra.mxu0 %v426
    %v842 = vpop.f32.mrf.mxu0
    %v843 = vadd.f32 0.0, %v842
    %v844 = vpop.f32.mrf.mxu0
    %v845 = vadd.f32 0.0, %v844
    %846 = vmatmul.bf16.gmra.mxu0 %v429
    %v847 = vpop.f32.mrf.mxu0
    %v848 = vadd.f32 0.0, %v847
    %v849 = vpop.f32.mrf.mxu0
    %v850 = vadd.f32 0.0, %v849
    %851 = vdwg.mxu0
    %v852 = vmul.f32 %v833, 1.0137771e-06
    %v853 = vmul.f32 %v835, 1.0137771e-06
    %v854 = vmul.f32 %v838, 1.0137771e-06
    %v855 = vmul.f32 %v840, 1.0137771e-06
    %v856 = vmul.f32 %v843, 1.0137771e-06
    %v857 = vmul.f32 %v845, 1.0137771e-06
    %v858 = vmul.f32 %v848, 1.0137771e-06
    %v859 = vmul.f32 %v850, 1.0137771e-06
    %v860 = vadd.f32 %v811, %v852
    %v861 = vadd.f32 %v812, %v853
    %v862 = vadd.f32 %v813, %v854
    %v863 = vadd.f32 %v814, %v855
    %v864 = vadd.f32 %v815, %v856
    %v865 = vadd.f32 %v816, %v857
    %v866 = vadd.f32 %v817, %v858
    %v867 = vadd.f32 %v818, %v859
    %v868 = vpack.c.bf16 %v835, %v833
    %v869 = vpack.c.bf16 %v840, %v838
    %v870 = vpack.c.bf16 %v845, %v843
    %v871 = vpack.c.bf16 %v850, %v848
    %872 = vmatpush.bf16.msra.mxu0 0
    %873 = vmatpush.bf16.msra.mxu0 0
    %874 = vmatpush.bf16.msra.mxu0 0
    %875 = vmatpush.bf16.msra.mxu0 0
    %876 = vmatpush.bf16.msra.mxu0 %v871
    %877 = vmatpush.bf16.msra.mxu0 %v870
    %878 = vmatpush.bf16.msra.mxu0 %v869
    %879 = vmatpush.bf16.msra.mxu0 %v868
    %880 = vmatmul.bf16.gmra.mxu0 %v420
    %v881 = vpop.f32.mrf.mxu0
    %v882 = vadd.f32 0.0, %v881
    %v883 = vpop.f32.mrf.mxu0
    %v884 = vadd.f32 0.0, %v883
    %885 = vmatmul.bf16.gmra.mxu0 %v423
    %v886 = vpop.f32.mrf.mxu0
    %v887 = vadd.f32 0.0, %v886
    %v888 = vpop.f32.mrf.mxu0
    %v889 = vadd.f32 0.0, %v888
    %890 = vmatmul.bf16.gmra.mxu0 %v426
    %v891 = vpop.f32.mrf.mxu0
    %v892 = vadd.f32 0.0, %v891
    %v893 = vpop.f32.mrf.mxu0
    %v894 = vadd.f32 0.0, %v893
    %895 = vmatmul.bf16.gmra.mxu0 %v429
    %v896 = vpop.f32.mrf.mxu0
    %v897 = vadd.f32 0.0, %v896
    %v898 = vpop.f32.mrf.mxu0
    %v899 = vadd.f32 0.0, %v898
    %900 = vdwg.mxu0
    %v901 = vmul.f32 %v882, 1.01377715e-07
    %v902 = vmul.f32 %v884, 1.01377715e-07
    %v903 = vmul.f32 %v887, 1.01377715e-07
    %v904 = vmul.f32 %v889, 1.01377715e-07
    %v905 = vmul.f32 %v892, 1.01377715e-07
    %v906 = vmul.f32 %v894, 1.01377715e-07
    %v907 = vmul.f32 %v897, 1.01377715e-07
    %v908 = vmul.f32 %v899, 1.01377715e-07
    %v909 = vadd.f32 %v860, %v901
    %v910 = vadd.f32 %v861, %v902
    %v911 = vadd.f32 %v862, %v903
    %v912 = vadd.f32 %v863, %v904
    %v913 = vadd.f32 %v864, %v905
    %v914 = vadd.f32 %v865, %v906
    %v915 = vadd.f32 %v866, %v907
    %v916 = vadd.f32 %v867, %v908
    %v917 = vmul.f32 %v260, %v909
    %v918 = vmul.f32 %v261, %v910
    %v919 = vmul.f32 %v262, %v911
    %v920 = vmul.f32 %v263, %v912
    %v921 = vmul.f32 %v264, %v913
    %v922 = vmul.f32 %v265, %v914
    %v923 = vmul.f32 %v266, %v915
    %v924 = vmul.f32 %v267, %v916
    %v925 = vld [vmem:[%s3] sm:$0x1]
    %v927 = vperm.slane %v925, 0
    %v929 = vadd.f32 %v917, %v927
    %v930 = vadd.f32 %v918, %v927
    %v931 = vadd.f32 %v919, %v927
    %v932 = vadd.f32 %v920, %v927
    %v933 = vadd.f32 %v921, %v927
    %v934 = vadd.f32 %v922, %v927
    %v935 = vadd.f32 %v923, %v927
    %v936 = vadd.f32 %v924, %v927
    %937 = vst [vmem:[#allocation3] sm:$0xff] %v929
    %938 = vst [vmem:[#allocation3 + $0x8] sm:$0xff] %v930
    %939 = vst [vmem:[#allocation3 + $0x10] sm:$0xff] %v931
    %940 = vst [vmem:[#allocation3 + $0x18] sm:$0xff] %v932
    %941 = vst [vmem:[#allocation3 + $0x20] sm:$0xff] %v933
    %942 = vst [vmem:[#allocation3 + $0x28] sm:$0xff] %v934
    %943 = vst [vmem:[#allocation3 + $0x30] sm:$0xff] %v935
    %944 = vst [vmem:[#allocation3 + $0x38] sm:$0xff] %v936
    // Predicated region
    $region18: #{tpu_custom_call.1} parent=1 // pred_check
      _
    $region19: #{tpu_custom_call.1} parent=1 // pred_check_branch
      %946 = sbr.rel (0) target = $region21
    $region20: #{tpu_custom_call.1} parent=1 // pred_region
      %948 = vsyncadd [#allocation4], 0
      %s949 = sshll.u32 [#allocation3], 4
      %s950 = int_to_ptr.vmem [resolvable:$true] %s949
      %s951 = sshll.u32 %s4, 4
      %s952 = int_to_ptr.hbm [resolvable:$true] %s951
      %957 = dma.vmem_to_hbm [thread:$0]  %s950, 1024, %s952, [#allocation4], 128, 128, 8
    $region21: #{tpu_custom_call.1} parent=1 // pred_fallthru
      _
    // Predicated region
    $region22: #{tpu_custom_call.1} parent=1 // pred_check
      _
    $region23: #{tpu_custom_call.1} parent=1 // pred_check_branch
      %959 = sbr.rel (0) target = $region25
    $region24: #{tpu_custom_call.1} parent=1 // pred_region
      %961 = dma.done [#allocation4], 1024
    $region25: #{tpu_custom_call.1} parent=1 // pred_fallthru
      _
    %962 = vsyncpa [#allocation4], 1

</llo_original>
